<compile_context>
chip_gen: v5e
topology: v5e:2x2
jax: 0.10.0
libtpu: 0.0.40
codegen_flags: <defaults>
</compile_context>

<pallas_src>
import jax
import jax.numpy as jnp
from jax import lax
from jax.experimental import pallas as pl
from jax.experimental.pallas import tpu as pltpu

EPS = 1e-5

# ~4 MiB per tile: x + out, each double-buffered -> ~16 MiB resident VMEM,
# comfortably inside the default scoped VMEM limit on v5e / v6e / v7x.
_TARGET_TILE_BYTES = 4 * 1024 * 1024


def _frozen_bn_kernel(x_ref, scale_ref, bias_ref, o_ref):
    # x_ref / o_ref : (rt, ct) tile of the (N*C, H*W) slab.
    # scale_ref / bias_ref : (rt, 1) per-row (= per-(n, c)) folded parameters.
    x = x_ref[...].astype(jnp.float32)
    o_ref[...] = (x * scale_ref[...] + bias_ref[...]).astype(o_ref.dtype)


def _round_down(v, m):
    return max(m, (v // m) * m)


def _pick_tiles(rows, cols, elem_bytes):
    target_elems = max(128, _TARGET_TILE_BYTES // elem_bytes)

    # Lane (last-dim) tile: full extent when it fits the budget (always legal),
    # otherwise a 128-multiple chunk (ragged tail is masked by Pallas).
    if cols <= target_elems:
        ct = cols
    else:
        ct = _round_down(target_elems, 128)

    # Sublane (second-to-last) tile: fill the remaining byte budget.
    sub = 8 if elem_bytes >= 4 else 16
    rt_target = max(1, target_elems // ct)
    if rows <= max(rt_target, sub):
        rt = rows                      # full extent: always legal
    else:
        rt = _round_down(min(rt_target, rows), sub)
    return rt, ct


@jax.jit
def frozen_batch_norm_2d(x, weight, bias, running_mean, running_var):
    """x: (N, C, H, W). Per-channel frozen buffers: (C,)."""
    N, C, H, W = x.shape
    rows, cols = N * C, H * W

    # Fold the frozen statistics once (tiny C-length vectors, done by XLA).
    scale_c = weight.astype(jnp.float32) * lax.rsqrt(
        running_var.astype(jnp.float32) + EPS)
    bias_c = bias.astype(jnp.float32) - running_mean.astype(jnp.float32) * scale_c

    # Per-row (= per (n, c)) parameters, shape (N*C, 1), broadcast across lanes
    # inside the kernel.
    scale_r = jnp.tile(scale_c, N)[:, None]
    bias_r = jnp.tile(bias_c, N)[:, None]

    # Free reshape (row-major contiguous): lane axis becomes H*W (lane-dense).
    x2 = x.reshape(rows, cols)

    rt, ct = _pick_tiles(rows, cols, x.dtype.itemsize)
    grid = (pl.cdiv(rows, rt), pl.cdiv(cols, ct))

    out2 = pl.pallas_call(
        _frozen_bn_kernel,
        out_shape=jax.ShapeDtypeStruct((rows, cols), x.dtype),
        grid=grid,
        in_specs=[
            pl.BlockSpec((rt, ct), lambda i, j: (i, j)),
            pl.BlockSpec((rt, 1), lambda i, j: (i, 0)),
            pl.BlockSpec((rt, 1), lambda i, j: (i, 0)),
        ],
        out_specs=pl.BlockSpec((rt, ct), lambda i, j: (i, j)),
        compiler_params=pltpu.CompilerParams(
            dimension_semantics=("parallel", "parallel"),
        ),
    )(x2, scale_r, bias_r)

    return out2.reshape(N, C, H, W)


def frozen_batch_norm_2d_ref(x, weight, bias, running_mean, running_var):
    w = weight.reshape(1, -1, 1, 1)
    b = bias.reshape(1, -1, 1, 1)
    rv = running_var.reshape(1, -1, 1, 1)
    rm = running_mean.reshape(1, -1, 1, 1)
    scale = w * lax.rsqrt(rv + EPS)
    bias_ = b - rm * scale
    return x * scale + bias_


if __name__ == "__main__":
    key = jax.random.PRNGKey(0)
    k_x, k_w, k_b, k_rm, k_rv = jax.random.split(key, 5)

    N, C, H, W = 2, 4, 16, 16
    x = jax.random.normal(k_x, (N, C, H, W), dtype=jnp.float32)

    # Deterministic "frozen" buffers; running_var > 0.
    weight = jax.random.normal(k_w, (C,), dtype=jnp.float32) * 0.1 + 1.0
    bias = jax.random.normal(k_b, (C,), dtype=jnp.float32) * 0.1
    running_mean = jax.random.normal(k_rm, (C,), dtype=jnp.float32) * 0.1
    running_var = jax.random.uniform(k_rv, (C,), dtype=jnp.float32,
                                     minval=0.5, maxval=1.5)

    out = jax.block_until_ready(
        frozen_batch_norm_2d(x, weight, bias, running_mean, running_var))
    ref = frozen_batch_norm_2d_ref(x, weight, bias, running_mean, running_var)
    assert out.shape == ref.shape and out.dtype == ref.dtype
    assert jnp.allclose(out, ref, atol=1e-5, rtol=1e-5)

    # bf16 activations: same kernel, half the HBM bytes (compute still in f32).
    xb = x.astype(jnp.bfloat16)
    outb = jax.block_until_ready(
        frozen_batch_norm_2d(xb, weight, bias, running_mean, running_var))
    refb = frozen_batch_norm_2d_ref(xb.astype(jnp.float32), weight, bias,
                                    running_mean, running_var)
    assert outb.dtype == jnp.bfloat16
    assert jnp.allclose(outb.astype(jnp.float32), refb, atol=3e-2, rtol=3e-2)

    print("KERNEL_OK")
</pallas_src>

<mosaic_0001>
module attributes {stable_mosaic.version = 11 : i64} {
  func.func @_frozen_bn_kernel(%arg0: i32, %arg1: i32, %arg2: memref<8x256xf32, #tpu.memory_space<vmem>>, %arg3: memref<8x1xf32, #tpu.memory_space<vmem>>, %arg4: memref<8x1xf32, #tpu.memory_space<vmem>>, %arg5: memref<8x256xf32, #tpu.memory_space<vmem>>) attributes {dimension_semantics = [#tpu.dimension_semantics<parallel>, #tpu.dimension_semantics<parallel>], iteration_bounds = array<i64: 1, 1>, scalar_prefetch = 0 : i64, scratch_operands = 0 : i64, tpu.core_type = #tpu.core_type<tc>, window_params = [{transform_indices = @transform_0, window_bounds = array<i64: 8, 256>}, {transform_indices = @transform_1, window_bounds = array<i64: 8, 1>}, {transform_indices = @transform_2, window_bounds = array<i64: 8, 1>}, {transform_indices = @transform_3, window_bounds = array<i64: 8, 256>}]} {
    %c0 = arith.constant 0 : index
    %c0_0 = arith.constant 0 : index
    %0 = vector.load %arg2[%c0, %c0_0] : memref<8x256xf32, #tpu.memory_space<vmem>>, vector<8x256xf32>
    %c0_1 = arith.constant 0 : index
    %c0_2 = arith.constant 0 : index
    %1 = vector.load %arg3[%c0_1, %c0_2] : memref<8x1xf32, #tpu.memory_space<vmem>>, vector<8x1xf32>
    %2 = vector.broadcast %1 : vector<8x1xf32> to vector<8x256xf32>
    %3 = arith.mulf %0, %2 : vector<8x256xf32>
    %c0_3 = arith.constant 0 : index
    %c0_4 = arith.constant 0 : index
    %4 = vector.load %arg4[%c0_3, %c0_4] : memref<8x1xf32, #tpu.memory_space<vmem>>, vector<8x1xf32>
    %5 = vector.broadcast %4 : vector<8x1xf32> to vector<8x256xf32>
    %6 = arith.addf %3, %5 : vector<8x256xf32>
    %c0_5 = arith.constant 0 : index
    %c0_6 = arith.constant 0 : index
    %7 = vector.load %arg5[%c0_5, %c0_6] : memref<8x256xf32, #tpu.memory_space<vmem>>, vector<8x256xf32>
    tpu.vector_store %arg5[%c0_5, %c0_6], %6 {strides = array<i32>} : memref<8x256xf32, #tpu.memory_space<vmem>>, vector<8x256xf32>,
    return
  }
  func.func @transform_0(%arg0: i32, %arg1: i32) -> (i32, i32) {
    %c0_i32 = arith.constant 0 : i32
    return %arg0, %arg1 : i32, i32
  }
  func.func @transform_1(%arg0: i32, %arg1: i32) -> (i32, i32) {
    %c0_i32 = arith.constant 0 : i32
    %c0_i32_0 = arith.constant 0 : i32
    return %arg0, %c0_i32 : i32, i32
  }
  func.func @transform_2(%arg0: i32, %arg1: i32) -> (i32, i32) {
    %c0_i32 = arith.constant 0 : i32
    %c0_i32_0 = arith.constant 0 : i32
    return %arg0, %c0_i32 : i32, i32
  }
  func.func @transform_3(%arg0: i32, %arg1: i32) -> (i32, i32) {
    %c0_i32 = arith.constant 0 : i32
    return %arg0, %arg1 : i32, i32
  }
}

</mosaic_0001>

<llo_original>
// kernel: tile.0
$region0: #{tile.0}
  %s0 = inlined_call_operand.vmem [shape: f32[2,4], index: 0, kind: input, shape index: {}]
  %s1 = inlined_call_operand.vmem [shape: f32[8,1], index: 1, kind: output, shape index: {}]
  $region1: #{tile.0} parent=0
    #allocation0 [shape = 'u8[4096]{0}', space=vmem, size = 0x1000, scoped, tag = 'scoped mem for input reshape']
    %s3 = ssub.s32 4, 1
    %v4 = vld [vmem:[%s0] sm:%s3]
    %5 = vst [vmem:[#allocation0] sm:%s3] %v4
    %v6 = vld [vmem:[#allocation0] sm:$0x3]
    %vm7 = vcmask 7168
    %8 = vst.msk [vmem:[%s1] ss:$4 sm:$0x3] %vm7, %v6
    %v9 = vld [vmem:[#allocation0] sm:$0x3]
    %10 = vrot.lane.b32.xlu0 %v9, 127
    %v11 = vpop.permute.xlu0 %10
    %vm12 = vcmask 7168
    %s13 = scalar_lea.vmem %s1, 1
    %14 = vst.msk [vmem:[%s13] ss:$4 sm:$0x3] %vm12, %v11
    %v15 = vld [vmem:[#allocation0] sm:$0x3]
    %16 = vrot.lane.b32.xlu0 %v15, 126
    %v17 = vpop.permute.xlu0 %16
    %vm18 = vcmask 7168
    %s19 = scalar_lea.vmem %s1, 2
    %20 = vst.msk [vmem:[%s19] ss:$4 sm:$0x3] %vm18, %v17
    %v21 = vld [vmem:[#allocation0] sm:$0x3]
    %22 = vrot.lane.b32.xlu0 %v21, 125
    %v23 = vpop.permute.xlu0 %22
    %vm24 = vcmask 7168
    %s25 = scalar_lea.vmem %s1, 3
    %26 = vst.msk [vmem:[%s25] ss:$4 sm:$0x3] %vm24, %v23

// kernel: tile.18
$region0: #{tile.18}
  #allocation0 [shape = 's32[1]{0}', space=sflag, size = 0x4, scoped, tag = 'scoped memory for tile.18']
  %s0 = inlined_call_operand.vmem [shape: f32[4], index: 0, kind: input, shape index: {}]
  %s1 = inlined_call_operand.vmem [shape: f32[2,4], index: 1, kind: output, shape index: {}]
  // Predicated region
  $region2: #{tile.18} parent=0 // pred_check
    _
  $region3: #{tile.18} parent=0 // pred_check_branch
    %3 = sbr.rel (0) target = $region5
  $region4: #{tile.18} parent=0 // pred_region
    _
  $region5: #{tile.18} parent=0 // pred_fallthru
    _
  %v4 = vld [vmem:[%s0] ss:$0 sm:$0xff]
  %5 = vst [vmem:[%s1] sm:$0x3] %v4

// kernel: frozen_batch_norm_2d.1
$region0: #{frozen_batch_norm_2d.1}
  #allocation0 [shape = 'u32[]', space=smem, size = 0x4, offset = 0x4, fixed_abs, tag = 'smem constant byte address 0x4 - core index']
  #allocation1 [shape = 'u32[72,128]{1,0:T(1,128)}', space=vmem, size = 0x9000, scoped, tag = 'internal scratch']
  %s0 = inlined_call_operand.vmem [shape: f32[8,256], index: 0, kind: input, shape index: {}]
  %s1 = inlined_call_operand.vmem [shape: f32[8,1], index: 1, kind: input, shape index: {}]
  %s2 = inlined_call_operand.vmem [shape: f32[8,1], index: 2, kind: input, shape index: {}]
  %s3 = inlined_call_operand.vmem [shape: f32[8,256], index: 3, kind: output, shape index: {}]
  %s4 = sld [smem:[#allocation0]]
  $region22: #{frozen_batch_norm_2d.1} parent=0
    _
  %s6 = ssub.s32 1, %s4
  %s7 = scalar_select 0, %s6, %s4
  // Predicated region
  $region2: #{frozen_batch_norm_2d.1} parent=0 // pred_check
    _
  $region3: #{frozen_batch_norm_2d.1} parent=0 // pred_check_branch
    %9 = sbr.rel (0) target = $region5
  $region4: #{frozen_batch_norm_2d.1} parent=0 // pred_region
    _
  $region5: #{frozen_batch_norm_2d.1} parent=0 // pred_fallthru
    _
  // Predicated region
  $region6: #{frozen_batch_norm_2d.1} parent=0 // pred_check
    _
  $region7: #{frozen_batch_norm_2d.1} parent=0 // pred_check_branch
    %11 = sbr.rel (0) target = $region9
  $region8: #{frozen_batch_norm_2d.1} parent=0 // pred_region
    _
  $region9: #{frozen_batch_norm_2d.1} parent=0 // pred_fallthru
    _
  // Predicated region
  $region10: #{frozen_batch_norm_2d.1} parent=0 // pred_check
    _
  $region11: #{frozen_batch_norm_2d.1} parent=0 // pred_check_branch
    %13 = sbr.rel (0) target = $region13
  $region12: #{frozen_batch_norm_2d.1} parent=0 // pred_region
    _
  $region13: #{frozen_batch_norm_2d.1} parent=0 // pred_fallthru
    _
  %v14 = vld [vmem:[%s0] sm:$0xff]
  %v15 = vld [vmem:[%s0 + $0x8] sm:$0xff]
  %v16 = vld [vmem:[%s1] sm:$0xff]
  %18 = vset.pattern.permute.xlu0 0
  %19 = vperm.xlu0 %18, %v16
  %v20 = vpop.permute.xlu0 %19
  %v22 = vmul.f32 %v14, %v20
  %v23 = vmul.f32 %v15, %v20
  %v24 = vld [vmem:[%s2] sm:$0xff]
  %26 = vset.pattern.permute.xlu0 0
  %27 = vperm.xlu0 %26, %v24
  %v28 = vpop.permute.xlu0 %27
  %v30 = vadd.f32 %v22, %v28
  %v31 = vadd.f32 %v23, %v28
  %32 = vst [vmem:[%s3] sm:$0xff] %v30
  %33 = vst [vmem:[%s3 + $0x8] sm:$0xff] %v31
  // Predicated region
  $region14: #{frozen_batch_norm_2d.1} parent=0 // pred_check
    _
  $region15: #{frozen_batch_norm_2d.1} parent=0 // pred_check_branch
    %35 = sbr.rel (0) target = $region17
  $region16: #{frozen_batch_norm_2d.1} parent=0 // pred_region
    _
  $region17: #{frozen_batch_norm_2d.1} parent=0 // pred_fallthru
    _
  // Predicated region
  $region18: #{frozen_batch_norm_2d.1} parent=0 // pred_check
    _
  $region19: #{frozen_batch_norm_2d.1} parent=0 // pred_check_branch
    %37 = sbr.rel (0) target = $region21
  $region20: #{frozen_batch_norm_2d.1} parent=0 // pred_region
    _
  $region21: #{frozen_batch_norm_2d.1} parent=0 // pred_fallthru
    _

</llo_original>
